<compile_context>
chip_gen: v7x
topology: tpu7x:2x2x1
jax: 0.10.0
libtpu: 0.0.40
codegen_flags: <defaults>
</compile_context>

<pallas_src>
import jax
import jax.numpy as jnp
from jax.experimental import pallas as pl
from jax.experimental.pallas import tpu as pltpu

ACTOR_SIZE_1 = 64
ACTOR_SIZE_2 = 32
BN_EPS = 1e-5
TILE_B_MAX = 512          # batch-tile rows (multiple of 8)
PARAM_ROWS = 8            # packed small-param tile = one (8,128) vreg
PARAM_LANES = 128


def _round_up(v, m):
    return ((v + m - 1) // m) * m


def _make_actor_kernel(batch, tile_b, state_size, action_size):
    a1, a2 = ACTOR_SIZE_1, ACTOR_SIZE_2
    inv_b = 1.0 / float(batch)

    def kernel(x_ref, w1_ref, w2_ref, w3_ref, pk_ref, o_ref,
               stats1, stats2, ss1, ss2):
        p = pl.program_id(0)   # pass: 0 = h1 stats, 1 = h2 stats, 2 = output
        t = pl.program_id(1)   # batch tile

        # Row-validity mask (zero-padded rows of the last tile must not
        # contribute to the BatchNorm statistics).
        rows = jax.lax.broadcasted_iota(jnp.int32, (tile_b, 1), 0) + t * tile_b
        mask = (rows < batch).astype(jnp.float32)

        # Layer-1 matmul (bf16 x bf16 -> f32 on the MXU); needed in all passes.
        h1 = jnp.dot(x_ref[...], w1_ref[...], preferred_element_type=jnp.float32)

        @pl.when(p == 0)
        def _():
            @pl.when(t == 0)
            def _():
                stats1[...] = jnp.zeros_like(stats1)

            hm = h1 * mask
            stats1[0:1, :] += jnp.sum(hm, axis=0, keepdims=True)
            stats1[1:2, :] += jnp.sum(hm * h1, axis=0, keepdims=True)
            o_ref[...] = jnp.zeros_like(o_ref)   # placeholder; overwritten in pass 2

        @pl.when(p >= 1)
        def _():
            # Finalize layer-1 BN (folded scale/shift) once at start of pass 1.
            @pl.when(jnp.logical_and(p == 1, t == 0))
            def _():
                mean1 = stats1[0:1, :] * inv_b
                var1 = jnp.maximum(stats1[1:2, :] * inv_b - mean1 * mean1, 0.0)
                scale1 = pk_ref[0:1, :a1] * jax.lax.rsqrt(var1 + BN_EPS)
                ss1[0:1, :] = scale1
                ss1[1:2, :] = pk_ref[1:2, :a1] - mean1 * scale1
                stats2[...] = jnp.zeros_like(stats2)

            # BN1 (single fused multiply-add) + ReLU, then layer-2 matmul.
            h1n = jnp.maximum(h1 * ss1[0:1, :] + ss1[1:2, :], 0.0)
            h2 = jnp.dot(h1n.astype(jnp.bfloat16), w2_ref[...],
                         preferred_element_type=jnp.float32)

            @pl.when(p == 1)
            def _():
                hm2 = h2 * mask
                stats2[0:1, :] += jnp.sum(hm2, axis=0, keepdims=True)
                stats2[1:2, :] += jnp.sum(hm2 * h2, axis=0, keepdims=True)
                o_ref[...] = jnp.zeros_like(o_ref)

            @pl.when(p == 2)
            def _():
                # Finalize layer-2 BN once at start of pass 2.
                @pl.when(t == 0)
                def _():
                    mean2 = stats2[0:1, :] * inv_b
                    var2 = jnp.maximum(stats2[1:2, :] * inv_b - mean2 * mean2, 0.0)
                    scale2 = pk_ref[2:3, :a2] * jax.lax.rsqrt(var2 + BN_EPS)
                    ss2[0:1, :] = scale2
                    ss2[1:2, :] = pk_ref[3:4, :a2] - mean2 * scale2

                h2n = jnp.maximum(h2 * ss2[0:1, :] + ss2[1:2, :], 0.0)
                h3 = jnp.dot(h2n.astype(jnp.bfloat16), w3_ref[...],
                             preferred_element_type=jnp.float32)
                h3 = h3 + pk_ref[4:5, :action_size]
                o_ref[...] = jnp.tanh(h3).astype(o_ref.dtype)

    return kernel


def actor_forward(x, params):
    """x: (batch, state_size) f32. Requires batch > 1 (training-mode BatchNorm)."""
    w1, g1, be1, w2, g2, be2, w3, b3 = params
    batch, state_size = x.shape
    action_size = w3.shape[1]
    a1, a2 = ACTOR_SIZE_1, ACTOR_SIZE_2
    assert max(a1, a2, action_size) <= PARAM_LANES

    # Batch tiling (rows zero-padded; BN stats masked to the true batch).
    tile_b = min(_round_up(batch, 8), TILE_B_MAX)
    b_pad = _round_up(batch, tile_b)
    nt = b_pad // tile_b

    # bf16 matmul operands (f32 accumulation inside the kernel).
    x_p = jnp.zeros((b_pad, state_size), jnp.bfloat16)
    x_p = x_p.at[:batch].set(x.astype(jnp.bfloat16))
    w1b = w1.astype(jnp.bfloat16)
    w2b = w2.astype(jnp.bfloat16)
    w3b = w3.astype(jnp.bfloat16)

    # Pack all small per-feature params into one (8,128) f32 tile (single DMA).
    pk = jnp.zeros((PARAM_ROWS, PARAM_LANES), jnp.float32)
    pk = pk.at[0, :a1].set(g1.reshape(-1))
    pk = pk.at[1, :a1].set(be1.reshape(-1))
    pk = pk.at[2, :a2].set(g2.reshape(-1))
    pk = pk.at[3, :a2].set(be2.reshape(-1))
    pk = pk.at[4, :action_size].set(b3.reshape(-1))

    kernel = _make_actor_kernel(batch, tile_b, state_size, action_size)

    cost = pl.CostEstimate(
        flops=2 * b_pad * (3 * state_size * a1 + 2 * a1 * a2 + a2 * action_size),
        transcendentals=b_pad * action_size + 2 * (a1 + a2),
        bytes_accessed=(3 * b_pad * state_size * 2            # x read once per pass (bf16)
                        + 3 * b_pad * action_size * 4         # out written per pass
                        + 2 * (state_size * a1 + a1 * a2 + a2 * action_size)
                        + PARAM_ROWS * PARAM_LANES * 4),
    )

    out_padded = pl.pallas_call(
        kernel,
        out_shape=jax.ShapeDtypeStruct((b_pad, action_size), jnp.float32),
        grid_spec=pltpu.PrefetchScalarGridSpec(
            num_scalar_prefetch=0,
            grid=(3, nt),   # (pass, batch-tile); pass must be the outer axis
            in_specs=[
                pl.BlockSpec((tile_b, state_size), lambda p, t: (t, 0)),
                pl.BlockSpec((state_size, a1), lambda p, t: (0, 0)),
                pl.BlockSpec((a1, a2), lambda p, t: (0, 0)),
                pl.BlockSpec((a2, action_size), lambda p, t: (0, 0)),
                pl.BlockSpec((PARAM_ROWS, PARAM_LANES), lambda p, t: (0, 0)),
            ],
            out_specs=pl.BlockSpec((tile_b, action_size), lambda p, t: (t, 0)),
            scratch_shapes=[
                pltpu.VMEM((2, a1), jnp.float32),   # stats1: sum / sumsq of h1
                pltpu.VMEM((2, a2), jnp.float32),   # stats2: sum / sumsq of h2
                pltpu.VMEM((2, a1), jnp.float32),   # ss1: scale / shift layer 1
                pltpu.VMEM((2, a2), jnp.float32),   # ss2: scale / shift layer 2
            ],
        ),
        compiler_params=pltpu.CompilerParams(
            # Both axes carry sequential dependencies (pass ordering + the
            # cross-tile BN-stat reduction), so neither can be "parallel".
            dimension_semantics=("arbitrary", "arbitrary"),
            vmem_limit_bytes=32 * 1024 * 1024,   # v7x-safe; tiles use ~100 KiB
        ),
        cost_estimate=cost,
    )(x_p, w1b, w2b, w3b, pk)

    return out_padded[:batch]


def actor_reference(x, params):
    """Pure-JAX f32 reference with identical (training-mode BN) semantics."""
    w1, g1, be1, w2, g2, be2, w3, b3 = params

    def bn_relu(h, g, b):
        mean = jnp.mean(h, axis=0, keepdims=True)
        var = jnp.mean((h - mean) * (h - mean), axis=0, keepdims=True)
        return jnp.maximum((h - mean) * jax.lax.rsqrt(var + BN_EPS) * g + b, 0.0)

    h = bn_relu(x @ w1, g1, be1)
    h = bn_relu(h @ w2, g2, be2)
    return jnp.tanh(h @ w3 + b3)


def init_params(key, state_size, action_size):
    """Deterministic init mirroring ActorNet.__init__ / initialize_params.

    Hidden-layer Linear biases (b1/b2) are omitted: under training-mode
    BatchNorm they are cancelled by the batch-mean subtraction, so dropping
    them does not change the forward output (saves 2 DMAs per call).
    """
    ks = jax.random.split(key, 4)

    def unif(k, shape, lim):
        return jax.random.uniform(k, shape, jnp.float32, -lim, lim)

    # init_hidden_layers uses lim = 1/sqrt(weight.size(0)) = 1/sqrt(out_features)
    lim1 = 1.0 / (ACTOR_SIZE_1 ** 0.5)
    lim2 = 1.0 / (ACTOR_SIZE_2 ** 0.5)

    # Weights stored as (in, out) — transpose of torch's (out, in).
    w1 = unif(ks[0], (state_size, ACTOR_SIZE_1), lim1)
    w2 = unif(ks[1], (ACTOR_SIZE_1, ACTOR_SIZE_2), lim2)
    w3 = unif(ks[2], (ACTOR_SIZE_2, action_size), 0.003)

    # Final-layer bias keeps torch's default Linear init: U(-1/sqrt(in), 1/sqrt(in)).
    b3 = unif(ks[3], (1, action_size), 1.0 / (ACTOR_SIZE_2 ** 0.5))

    # BatchNorm affine params: weight=1, bias=0.
    g1 = jnp.ones((1, ACTOR_SIZE_1), jnp.float32)
    be1 = jnp.zeros((1, ACTOR_SIZE_1), jnp.float32)
    g2 = jnp.ones((1, ACTOR_SIZE_2), jnp.float32)
    be2 = jnp.zeros((1, ACTOR_SIZE_2), jnp.float32)

    return (w1, g1, be1, w2, g2, be2, w3, b3)


if __name__ == "__main__":
    batch = 8
    state_size = 16
    action_size = 8

    key = jax.random.PRNGKey(0)
    k_x, k_p = jax.random.split(key)
    x = jax.random.normal(k_x, (batch, state_size), jnp.float32)
    params = init_params(k_p, state_size, action_size)

    out = actor_forward(x, params)
    jax.block_until_ready(out)

    ref = actor_reference(x, params)
    assert out.shape == (batch, action_size)
    assert bool(jnp.all(jnp.abs(out) <= 1.0))          # tanh range sanity check
    assert bool(jnp.max(jnp.abs(out - ref)) < 5e-2)    # bf16-matmul tolerance
    # TODO(synk): eval-mode BN (running stats) and the batch==1 training-mode
    # guard are not implemented; this kernel covers the training-mode forward.
    print("KERNEL_OK")
</pallas_src>

<mosaic_0001>
module attributes {stable_mosaic.version = 11 : i64} {
  func.func @kernel(%arg0: i32, %arg1: i32, %arg2: memref<8x16xbf16, #tpu.memory_space<vmem>>, %arg3: memref<16x64xbf16, #tpu.memory_space<vmem>>, %arg4: memref<64x32xbf16, #tpu.memory_space<vmem>>, %arg5: memref<32x8xbf16, #tpu.memory_space<vmem>>, %arg6: memref<8x128xf32, #tpu.memory_space<vmem>>, %arg7: memref<8x8xf32, #tpu.memory_space<vmem>>, %arg8: memref<2x64xf32, #tpu.memory_space<vmem>>, %arg9: memref<2x32xf32, #tpu.memory_space<vmem>>, %arg10: memref<2x64xf32, #tpu.memory_space<vmem>>, %arg11: memref<2x32xf32, #tpu.memory_space<vmem>>) attributes {dimension_semantics = [#tpu.dimension_semantics<arbitrary>, #tpu.dimension_semantics<arbitrary>], iteration_bounds = array<i64: 3, 1>, scalar_prefetch = 0 : i64, scratch_operands = 4 : i64, tpu.core_type = #tpu.core_type<tc>, window_params = [{transform_indices = @transform_0, window_bounds = array<i64: 8, 16>}, {pipeline_mode = #tpu.pipeline_mode<synchronous>, transform_indices = @transform_1, window_bounds = array<i64: 16, 64>}, {pipeline_mode = #tpu.pipeline_mode<synchronous>, transform_indices = @transform_2, window_bounds = array<i64: 64, 32>}, {pipeline_mode = #tpu.pipeline_mode<synchronous>, transform_indices = @transform_3, window_bounds = array<i64: 32, 8>}, {pipeline_mode = #tpu.pipeline_mode<synchronous>, transform_indices = @transform_4, window_bounds = array<i64: 8, 128>}, {transform_indices = @transform_5, window_bounds = array<i64: 8, 8>}]} {
    %0 = tpu.iota {dimensions = array<i32: 0>} : vector<8x1xi32>
    %c8_i32 = arith.constant 8 : i32
    %1 = arith.muli %arg1, %c8_i32 : i32
    %2 = vector.broadcast %1 : i32 to vector<8x1xi32>
    %3 = arith.addi %0, %2 : vector<8x1xi32>
    %c8_i32_0 = arith.constant 8 : i32
    %4 = vector.broadcast %c8_i32_0 : i32 to vector<8x1xi32>
    %5 = arith.cmpi slt, %3, %4 : vector<8x1xi32>
    %6 = arith.extui %5 : vector<8x1xi1> to vector<8x1xi32>
    %7 = arith.sitofp %6 : vector<8x1xi32> to vector<8x1xf32>
    %c0 = arith.constant 0 : index
    %c0_1 = arith.constant 0 : index
    %8 = vector.load %arg2[%c0, %c0_1] : memref<8x16xbf16, #tpu.memory_space<vmem>>, vector<8x16xbf16>
    %c0_2 = arith.constant 0 : index
    %c0_3 = arith.constant 0 : index
    %9 = vector.load %arg3[%c0_2, %c0_3] : memref<16x64xbf16, #tpu.memory_space<vmem>>, vector<16x64xbf16>
    %cst = arith.constant dense<0.000000e+00> : vector<8x64xf32>
    %10 = tpu.matmul %8, %9, %cst {dimension_numbers = #tpu.dot_dimension_numbers<[1], [0], [0], [1], [0, 0, 1, 1], [], []>} : vector<8x16xbf16>, vector<16x64xbf16>, vector<8x64xf32> -> vector<8x64xf32>
    %c0_i32 = arith.constant 0 : i32
    %11 = arith.cmpi eq, %arg0, %c0_i32 : i32
    %12 = arith.extui %11 : i1 to i32
    %c0_i32_4 = arith.constant 0 : i32
    %13 = arith.cmpi ne, %12, %c0_i32_4 : i32
    scf.if %13 {
      %c0_i32_6 = arith.constant 0 : i32
      %17 = arith.cmpi eq, %arg1, %c0_i32_6 : i32
      %18 = arith.extui %17 : i1 to i32
      %c0_i32_7 = arith.constant 0 : i32
      %19 = arith.cmpi ne, %18, %c0_i32_7 : i32
      scf.if %19 {
        %cst_20 = arith.constant 0.000000e+00 : f32
        %35 = vector.broadcast %cst_20 : f32 to vector<2x64xf32>
        %c0_21 = arith.constant 0 : index
        %c0_22 = arith.constant 0 : index
        %36 = vector.load %arg8[%c0_21, %c0_22] : memref<2x64xf32, #tpu.memory_space<vmem>>, vector<2x64xf32>
        tpu.vector_store %arg8[%c0_21, %c0_22], %35 {strides = array<i32>} : memref<2x64xf32, #tpu.memory_space<vmem>>, vector<2x64xf32>,
      } else {
      }
      %20 = vector.broadcast %7 : vector<8x1xf32> to vector<8x64xf32>
      %21 = arith.mulf %10, %20 : vector<8x64xf32>
      %c0_8 = arith.constant 0 : index
      %c0_9 = arith.constant 0 : index
      %22 = vector.load %arg8[%c0_8, %c0_9] : memref<2x64xf32, #tpu.memory_space<vmem>>, vector<1x64xf32>
      %cst_10 = arith.constant dense<0.000000e+00> : vector<64xf32>
      %23 = vector.multi_reduction <add>, %21, %cst_10 [0] : vector<8x64xf32> to vector<64xf32>
      %24 = vector.shape_cast %23 : vector<64xf32> to vector<1x64xf32>
      %25 = arith.addf %22, %24 : vector<1x64xf32>
      %c0_11 = arith.constant 0 : index
      %c0_12 = arith.constant 0 : index
      %26 = vector.load %arg8[%c0_11, %c0_12] : memref<2x64xf32, #tpu.memory_space<vmem>>, vector<1x64xf32>
      tpu.vector_store %arg8[%c0_11, %c0_12], %25 {strides = array<i32>} : memref<2x64xf32, #tpu.memory_space<vmem>>, vector<1x64xf32>,
      %c1 = arith.constant 1 : index
      %c0_13 = arith.constant 0 : index
      %27 = vector.load %arg8[%c1, %c0_13] : memref<2x64xf32, #tpu.memory_space<vmem>>, vector<1x64xf32>
      %28 = arith.mulf %21, %10 : vector<8x64xf32>
      %cst_14 = arith.constant dense<0.000000e+00> : vector<64xf32>
      %29 = vector.multi_reduction <add>, %28, %cst_14 [0] : vector<8x64xf32> to vector<64xf32>
      %30 = vector.shape_cast %29 : vector<64xf32> to vector<1x64xf32>
      %31 = arith.addf %27, %30 : vector<1x64xf32>
      %c1_15 = arith.constant 1 : index
      %c0_16 = arith.constant 0 : index
      %32 = vector.load %arg8[%c1_15, %c0_16] : memref<2x64xf32, #tpu.memory_space<vmem>>, vector<1x64xf32>
      tpu.vector_store %arg8[%c1_15, %c0_16], %31 {strides = array<i32>} : memref<2x64xf32, #tpu.memory_space<vmem>>, vector<1x64xf32>,
      %cst_17 = arith.constant 0.000000e+00 : f32
      %33 = vector.broadcast %cst_17 : f32 to vector<8x8xf32>
      %c0_18 = arith.constant 0 : index
      %c0_19 = arith.constant 0 : index
      %34 = vector.load %arg7[%c0_18, %c0_19] : memref<8x8xf32, #tpu.memory_space<vmem>>, vector<8x8xf32>
      tpu.vector_store %arg7[%c0_18, %c0_19], %33 {strides = array<i32>} : memref<8x8xf32, #tpu.memory_space<vmem>>, vector<8x8xf32>,
    } else {
    }
    %c1_i32 = arith.constant 1 : i32
    %14 = arith.cmpi sge, %arg0, %c1_i32 : i32
    %15 = arith.extui %14 : i1 to i32
    %c0_i32_5 = arith.constant 0 : i32
    %16 = arith.cmpi ne, %15, %c0_i32_5 : i32
    scf.if %16 {
      %c1_i32_6 = arith.constant 1 : i32
      %17 = arith.cmpi eq, %arg0, %c1_i32_6 : i32
      %c0_i32_7 = arith.constant 0 : i32
      %18 = arith.cmpi eq, %arg1, %c0_i32_7 : i32
      %19 = arith.andi %17, %18 : i1
      %20 = arith.extui %19 : i1 to i32
      %c0_i32_8 = arith.constant 0 : i32
      %21 = arith.cmpi ne, %20, %c0_i32_8 : i32
      scf.if %21 {
        %c0_19 = arith.constant 0 : index
        %c0_20 = arith.constant 0 : index
        %39 = vector.load %arg8[%c0_19, %c0_20] : memref<2x64xf32, #tpu.memory_space<vmem>>, vector<1x64xf32>
        %cst_21 = arith.constant 1.250000e-01 : f32
        %40 = vector.broadcast %cst_21 : f32 to vector<1x64xf32>
        %41 = arith.mulf %39, %40 : vector<1x64xf32>
        %c1_22 = arith.constant 1 : index
        %c0_23 = arith.constant 0 : index
        %42 = vector.load %arg8[%c1_22, %c0_23] : memref<2x64xf32, #tpu.memory_space<vmem>>, vector<1x64xf32>
        %cst_24 = arith.constant 1.250000e-01 : f32
        %43 = vector.broadcast %cst_24 : f32 to vector<1x64xf32>
        %44 = arith.mulf %42, %43 : vector<1x64xf32>
        %45 = arith.mulf %41, %41 : vector<1x64xf32>
        %46 = arith.subf %44, %45 : vector<1x64xf32>
        %cst_25 = arith.constant 0.000000e+00 : f32
        %47 = vector.broadcast %cst_25 : f32 to vector<1x64xf32>
        %48 = arith.maximumf %46, %47 : vector<1x64xf32>
        %c0_26 = arith.constant 0 : index
        %c0_27 = arith.constant 0 : index
        %49 = vector.load %arg6[%c0_26, %c0_27] : memref<8x128xf32, #tpu.memory_space<vmem>>, vector<1x64xf32>
        %cst_28 = arith.constant 9.99999974E-6 : f32
        %50 = vector.broadcast %cst_28 : f32 to vector<1x64xf32>
        %51 = arith.addf %48, %50 : vector<1x64xf32>
        %52 = math.rsqrt %51 : vector<1x64xf32>
        %53 = arith.mulf %49, %52 : vector<1x64xf32>
        %c0_29 = arith.constant 0 : index
        %c0_30 = arith.constant 0 : index
        %54 = vector.load %arg10[%c0_29, %c0_30] : memref<2x64xf32, #tpu.memory_space<vmem>>, vector<1x64xf32>
        tpu.vector_store %arg10[%c0_29, %c0_30], %53 {strides = array<i32>} : memref<2x64xf32, #tpu.memory_space<vmem>>, vector<1x64xf32>,
        %c1_31 = arith.constant 1 : index
        %c0_32 = arith.constant 0 : index
        %55 = vector.load %arg6[%c1_31, %c0_32] : memref<8x128xf32, #tpu.memory_space<vmem>>, vector<1x64xf32>
        %56 = arith.mulf %41, %53 : vector<1x64xf32>
        %57 = arith.subf %55, %56 : vector<1x64xf32>
        %c1_33 = arith.constant 1 : index
        %c0_34 = arith.constant 0 : index
        %58 = vector.load %arg10[%c1_33, %c0_34] : memref<2x64xf32, #tpu.memory_space<vmem>>, vector<1x64xf32>
        tpu.vector_store %arg10[%c1_33, %c0_34], %57 {strides = array<i32>} : memref<2x64xf32, #tpu.memory_space<vmem>>, vector<1x64xf32>,
        %cst_35 = arith.constant 0.000000e+00 : f32
        %59 = vector.broadcast %cst_35 : f32 to vector<2x32xf32>
        %c0_36 = arith.constant 0 : index
        %c0_37 = arith.constant 0 : index
        %60 = vector.load %arg9[%c0_36, %c0_37] : memref<2x32xf32, #tpu.memory_space<vmem>>, vector<2x32xf32>
        tpu.vector_store %arg9[%c0_36, %c0_37], %59 {strides = array<i32>} : memref<2x32xf32, #tpu.memory_space<vmem>>, vector<2x32xf32>,
      } else {
      }
      %c0_9 = arith.constant 0 : index
      %c0_10 = arith.constant 0 : index
      %22 = vector.load %arg10[%c0_9, %c0_10] : memref<2x64xf32, #tpu.memory_space<vmem>>, vector<1x64xf32>
      %23 = vector.broadcast %22 : vector<1x64xf32> to vector<8x64xf32>
      %24 = arith.mulf %10, %23 : vector<8x64xf32>
      %c1 = arith.constant 1 : index
      %c0_11 = arith.constant 0 : index
      %25 = vector.load %arg10[%c1, %c0_11] : memref<2x64xf32, #tpu.memory_space<vmem>>, vector<1x64xf32>
      %26 = vector.broadcast %25 : vector<1x64xf32> to vector<8x64xf32>
      %27 = arith.addf %24, %26 : vector<8x64xf32>
      %cst_12 = arith.constant 0.000000e+00 : f32
      %28 = vector.broadcast %cst_12 : f32 to vector<8x64xf32>
      %29 = arith.maximumf %27, %28 : vector<8x64xf32>
      %30 = arith.truncf %29 : vector<8x64xf32> to vector<8x64xbf16>
      %c0_13 = arith.constant 0 : index
      %c0_14 = arith.constant 0 : index
      %31 = vector.load %arg4[%c0_13, %c0_14] : memref<64x32xbf16, #tpu.memory_space<vmem>>, vector<64x32xbf16>
      %cst_15 = arith.constant dense<0.000000e+00> : vector<8x32xf32>
      %32 = tpu.matmul %30, %31, %cst_15 {dimension_numbers = #tpu.dot_dimension_numbers<[1], [0], [0], [1], [0, 0, 1, 1], [], []>} : vector<8x64xbf16>, vector<64x32xbf16>, vector<8x32xf32> -> vector<8x32xf32>
      %c1_i32_16 = arith.constant 1 : i32
      %33 = arith.cmpi eq, %arg0, %c1_i32_16 : i32
      %34 = arith.extui %33 : i1 to i32
      %c0_i32_17 = arith.constant 0 : i32
      %35 = arith.cmpi ne, %34, %c0_i32_17 : i32
      scf.if %35 {
        %39 = vector.broadcast %7 : vector<8x1xf32> to vector<8x32xf32>
        %40 = arith.mulf %32, %39 : vector<8x32xf32>
        %c0_19 = arith.constant 0 : index
        %c0_20 = arith.constant 0 : index
        %41 = vector.load %arg9[%c0_19, %c0_20] : memref<2x32xf32, #tpu.memory_space<vmem>>, vector<1x32xf32>
        %cst_21 = arith.constant dense<0.000000e+00> : vector<32xf32>
        %42 = vector.multi_reduction <add>, %40, %cst_21 [0] : vector<8x32xf32> to vector<32xf32>
        %43 = vector.shape_cast %42 : vector<32xf32> to vector<1x32xf32>
        %44 = arith.addf %41, %43 : vector<1x32xf32>
        %c0_22 = arith.constant 0 : index
        %c0_23 = arith.constant 0 : index
        %45 = vector.load %arg9[%c0_22, %c0_23] : memref<2x32xf32, #tpu.memory_space<vmem>>, vector<1x32xf32>
        tpu.vector_store %arg9[%c0_22, %c0_23], %44 {strides = array<i32>} : memref<2x32xf32, #tpu.memory_space<vmem>>, vector<1x32xf32>,
        %c1_24 = arith.constant 1 : index
        %c0_25 = arith.constant 0 : index
        %46 = vector.load %arg9[%c1_24, %c0_25] : memref<2x32xf32, #tpu.memory_space<vmem>>, vector<1x32xf32>
        %47 = arith.mulf %40, %32 : vector<8x32xf32>
        %cst_26 = arith.constant dense<0.000000e+00> : vector<32xf32>
        %48 = vector.multi_reduction <add>, %47, %cst_26 [0] : vector<8x32xf32> to vector<32xf32>
        %49 = vector.shape_cast %48 : vector<32xf32> to vector<1x32xf32>
        %50 = arith.addf %46, %49 : vector<1x32xf32>
        %c1_27 = arith.constant 1 : index
        %c0_28 = arith.constant 0 : index
        %51 = vector.load %arg9[%c1_27, %c0_28] : memref<2x32xf32, #tpu.memory_space<vmem>>, vector<1x32xf32>
        tpu.vector_store %arg9[%c1_27, %c0_28], %50 {strides = array<i32>} : memref<2x32xf32, #tpu.memory_space<vmem>>, vector<1x32xf32>,
        %cst_29 = arith.constant 0.000000e+00 : f32
        %52 = vector.broadcast %cst_29 : f32 to vector<8x8xf32>
        %c0_30 = arith.constant 0 : index
        %c0_31 = arith.constant 0 : index
        %53 = vector.load %arg7[%c0_30, %c0_31] : memref<8x8xf32, #tpu.memory_space<vmem>>, vector<8x8xf32>
        tpu.vector_store %arg7[%c0_30, %c0_31], %52 {strides = array<i32>} : memref<8x8xf32, #tpu.memory_space<vmem>>, vector<8x8xf32>,
      } else {
      }
      %c2_i32 = arith.constant 2 : i32
      %36 = arith.cmpi eq, %arg0, %c2_i32 : i32
      %37 = arith.extui %36 : i1 to i32
      %c0_i32_18 = arith.constant 0 : i32
      %38 = arith.cmpi ne, %37, %c0_i32_18 : i32
      scf.if %38 {
        %c0_i32_19 = arith.constant 0 : i32
        %39 = arith.cmpi eq, %arg1, %c0_i32_19 : i32
        %40 = arith.extui %39 : i1 to i32
        %c0_i32_20 = arith.constant 0 : i32
        %41 = arith.cmpi ne, %40, %c0_i32_20 : i32
        scf.if %41 {
          %c0_32 = arith.constant 0 : index
          %c0_33 = arith.constant 0 : index
          %58 = vector.load %arg9[%c0_32, %c0_33] : memref<2x32xf32, #tpu.memory_space<vmem>>, vector<1x32xf32>
          %cst_34 = arith.constant 1.250000e-01 : f32
          %59 = vector.broadcast %cst_34 : f32 to vector<1x32xf32>
          %60 = arith.mulf %58, %59 : vector<1x32xf32>
          %c1_35 = arith.constant 1 : index
          %c0_36 = arith.constant 0 : index
          %61 = vector.load %arg9[%c1_35, %c0_36] : memref<2x32xf32, #tpu.memory_space<vmem>>, vector<1x32xf32>
          %cst_37 = arith.constant 1.250000e-01 : f32
          %62 = vector.broadcast %cst_37 : f32 to vector<1x32xf32>
          %63 = arith.mulf %61, %62 : vector<1x32xf32>
          %64 = arith.mulf %60, %60 : vector<1x32xf32>
          %65 = arith.subf %63, %64 : vector<1x32xf32>
          %cst_38 = arith.constant 0.000000e+00 : f32
          %66 = vector.broadcast %cst_38 : f32 to vector<1x32xf32>
          %67 = arith.maximumf %65, %66 : vector<1x32xf32>
          %c2 = arith.constant 2 : index
          %c0_39 = arith.constant 0 : index
          %68 = vector.load %arg6[%c2, %c0_39] : memref<8x128xf32, #tpu.memory_space<vmem>>, vector<1x32xf32>
          %cst_40 = arith.constant 9.99999974E-6 : f32
          %69 = vector.broadcast %cst_40 : f32 to vector<1x32xf32>
          %70 = arith.addf %67, %69 : vector<1x32xf32>
          %71 = math.rsqrt %70 : vector<1x32xf32>
          %72 = arith.mulf %68, %71 : vector<1x32xf32>
          %c0_41 = arith.constant 0 : index
          %c0_42 = arith.constant 0 : index
          %73 = vector.load %arg11[%c0_41, %c0_42] : memref<2x32xf32, #tpu.memory_space<vmem>>, vector<1x32xf32>
          tpu.vector_store %arg11[%c0_41, %c0_42], %72 {strides = array<i32>} : memref<2x32xf32, #tpu.memory_space<vmem>>, vector<1x32xf32>,
          %c3 = arith.constant 3 : index
          %c0_43 = arith.constant 0 : index
          %74 = vector.load %arg6[%c3, %c0_43] : memref<8x128xf32, #tpu.memory_space<vmem>>, vector<1x32xf32>
          %75 = arith.mulf %60, %72 : vector<1x32xf32>
          %76 = arith.subf %74, %75 : vector<1x32xf32>
          %c1_44 = arith.constant 1 : index
          %c0_45 = arith.constant 0 : index
          %77 = vector.load %arg11[%c1_44, %c0_45] : memref<2x32xf32, #tpu.memory_space<vmem>>, vector<1x32xf32>
          tpu.vector_store %arg11[%c1_44, %c0_45], %76 {strides = array<i32>} : memref<2x32xf32, #tpu.memory_space<vmem>>, vector<1x32xf32>,
        } else {
        }
        %c0_21 = arith.constant 0 : index
        %c0_22 = arith.constant 0 : index
        %42 = vector.load %arg11[%c0_21, %c0_22] : memref<2x32xf32, #tpu.memory_space<vmem>>, vector<1x32xf32>
        %43 = vector.broadcast %42 : vector<1x32xf32> to vector<8x32xf32>
        %44 = arith.mulf %32, %43 : vector<8x32xf32>
        %c1_23 = arith.constant 1 : index
        %c0_24 = arith.constant 0 : index
        %45 = vector.load %arg11[%c1_23, %c0_24] : memref<2x32xf32, #tpu.memory_space<vmem>>, vector<1x32xf32>
        %46 = vector.broadcast %45 : vector<1x32xf32> to vector<8x32xf32>
        %47 = arith.addf %44, %46 : vector<8x32xf32>
        %cst_25 = arith.constant 0.000000e+00 : f32
        %48 = vector.broadcast %cst_25 : f32 to vector<8x32xf32>
        %49 = arith.maximumf %47, %48 : vector<8x32xf32>
        %50 = arith.truncf %49 : vector<8x32xf32> to vector<8x32xbf16>
        %c0_26 = arith.constant 0 : index
        %c0_27 = arith.constant 0 : index
        %51 = vector.load %arg5[%c0_26, %c0_27] : memref<32x8xbf16, #tpu.memory_space<vmem>>, vector<32x8xbf16>
        %cst_28 = arith.constant dense<0.000000e+00> : vector<8x8xf32>
        %52 = tpu.matmul %50, %51, %cst_28 {dimension_numbers = #tpu.dot_dimension_numbers<[1], [0], [0], [1], [0, 0, 1, 1], [], []>} : vector<8x32xbf16>, vector<32x8xbf16>, vector<8x8xf32> -> vector<8x8xf32>
        %c4 = arith.constant 4 : index
        %c0_29 = arith.constant 0 : index
        %53 = vector.load %arg6[%c4, %c0_29] : memref<8x128xf32, #tpu.memory_space<vmem>>, vector<1x8xf32>
        %54 = vector.broadcast %53 : vector<1x8xf32> to vector<8x8xf32>
        %55 = arith.addf %52, %54 : vector<8x8xf32>
        %56 = math.tanh %55 : vector<8x8xf32>
        %c0_30 = arith.constant 0 : index
        %c0_31 = arith.constant 0 : index
        %57 = vector.load %arg7[%c0_30, %c0_31] : memref<8x8xf32, #tpu.memory_space<vmem>>, vector<8x8xf32>
        tpu.vector_store %arg7[%c0_30, %c0_31], %56 {strides = array<i32>} : memref<8x8xf32, #tpu.memory_space<vmem>>, vector<8x8xf32>,
      } else {
      }
    } else {
    }
    return
  }
  func.func @transform_0(%arg0: i32, %arg1: i32) -> (i32, i32) {
    %c0_i32 = arith.constant 0 : i32
    %c0_i32_0 = arith.constant 0 : i32
    return %arg1, %c0_i32 : i32, i32
  }
  func.func @transform_1(%arg0: i32, %arg1: i32) -> (i32, i32) {
    %c0_i32 = arith.constant 0 : i32
    %c0_i32_0 = arith.constant 0 : i32
    %c0_i32_1 = arith.constant 0 : i32
    return %c0_i32, %c0_i32_0 : i32, i32
  }
  func.func @transform_2(%arg0: i32, %arg1: i32) -> (i32, i32) {
    %c0_i32 = arith.constant 0 : i32
    %c0_i32_0 = arith.constant 0 : i32
    %c0_i32_1 = arith.constant 0 : i32
    return %c0_i32, %c0_i32_0 : i32, i32
  }
  func.func @transform_3(%arg0: i32, %arg1: i32) -> (i32, i32) {
    %c0_i32 = arith.constant 0 : i32
    %c0_i32_0 = arith.constant 0 : i32
    %c0_i32_1 = arith.constant 0 : i32
    return %c0_i32, %c0_i32_0 : i32, i32
  }
  func.func @transform_4(%arg0: i32, %arg1: i32) -> (i32, i32) {
    %c0_i32 = arith.constant 0 : i32
    %c0_i32_0 = arith.constant 0 : i32
    %c0_i32_1 = arith.constant 0 : i32
    return %c0_i32, %c0_i32_0 : i32, i32
  }
  func.func @transform_5(%arg0: i32, %arg1: i32) -> (i32, i32) {
    %c0_i32 = arith.constant 0 : i32
    %c0_i32_0 = arith.constant 0 : i32
    return %arg1, %c0_i32 : i32, i32
  }
}

</mosaic_0001>

<llo_original>
// kernel: tpu_custom_call.1
$region0: #{tpu_custom_call.1}
  #allocation0 [shape = 'u32[]', space=smem, size = 0x4, offset = 0x4, fixed_abs, tag = 'smem constant byte address 0x4 - core index']
  #allocation1 [shape = 'u32[144,128]{1,0:T(1,128)}', space=vmem, size = 0x12000, scoped, tag = 'internal scratch']
  #allocation2 [shape = 'f32[2,64]{1,0:T(2,128)}', space=vmem, size = 0x400, scoped, tag = 'scratch operand']
  #allocation3 [shape = 'f32[2,32]{1,0:T(2,128)}', space=vmem, size = 0x400, scoped, tag = 'scratch operand']
  #allocation4 [shape = 'f32[2,64]{1,0:T(2,128)}', space=vmem, size = 0x400, scoped, tag = 'scratch operand']
  #allocation5 [shape = 'f32[2,32]{1,0:T(2,128)}', space=vmem, size = 0x400, scoped, tag = 'scratch operand']
  %s0 = inlined_call_operand.vmem [shape: bf16[8,16], index: 0, kind: input, shape index: {}]
  %s1 = inlined_call_operand.vmem [shape: bf16[16,64], index: 1, kind: input, shape index: {}]
  %s2 = inlined_call_operand.vmem [shape: bf16[64,32], index: 2, kind: input, shape index: {}]
  %s3 = inlined_call_operand.vmem [shape: bf16[32,8], index: 3, kind: input, shape index: {}]
  %s4 = inlined_call_operand.vmem [shape: f32[8,128], index: 4, kind: input, shape index: {}]
  %s5 = inlined_call_operand.hbm [shape: f32[8,8], index: 5, kind: output, shape index: {}]
  %s6 = sld [smem:[#allocation0]]
  $region81: #{tpu_custom_call.1} parent=0
    _
  %s8 = ssub.s32 1, %s6
  %s9 = scalar_select 0, %s8, %s6
  $region1: #{tpu_custom_call.1} parent=0
    #allocation6 [shape = 'u8[4096]{0}', space=vmem, size = 0x1000, scoped, tag = 'output window, operand 0, single buffered']
    #allocation7 [shape = 's32[2]{0}', space=sflag, size = 0x8, scoped, tag = 'scoped memory for tpu_custom_call.1']
    %10 = vsyncpa [#allocation7], 0
    loop: start=0, step=1, limit=5
    $region2: #{tpu_custom_call.1} parent=1 // loop_pre_header
      _
    $region3: #{tpu_custom_call.1} parent=1 // loop_header
      %s12 = sphi 0, %s16
      %p13 = scmp.ge.s32.totalorder %s12, 5
      %s19 = sphi 0, %s31
      %s20 = sphi 0, %s27
      %s21 = sphi 0, %s19
      %s22 = sphi 0, %s20
      %s23 = sphi 0, %s21
      %s24 = sphi 0, %s22
      %s34 = sphi 0, %s36
      %s37 = sphi 0, %s34
      %s38 = sphi 0, %s37
      %s54 = sphi 0, %s38
      %s58 = sphi 0, %s58
      %s60 = sphi 0, %s58
      %s61 = sphi 0, %s60
      %s75 = sphi 0, %s61
      %s79 = sphi 0, %s79
      %s81 = sphi 0, %s79
      %s82 = sphi 0, %s81
      %s96 = sphi 0, %s82
      %s100 = sphi 0, %s100
      %s102 = sphi 0, %s100
      %s103 = sphi 0, %s102
      %s117 = sphi 0, %s103
      %s121 = sphi 0, %s121
      %s123 = sphi 0, %s121
      %s124 = sphi 0, %s123
      %s138 = sphi 0, %s124
      %s144 = sphi 0, %s146
      %s147 = sphi 0, %s144
      %s148 = sphi 0, %s147
      %s164 = sphi 0, %s148
    $region4: #{tpu_custom_call.1} parent=1 // loop_header_branch
      %15 = sbr.rel (%p13) target = $region8
    $region5: #{tpu_custom_call.1} parent=1 // loop_body
      %s17 = ssub.s32 %s12, 1
      %s18 = ssub.s32 %s12, 2
      %s25 = sadd.s32 1, %s20
      %p26 = scmp.ge.s32.totalorder %s25, 1
      %s27 = scalar_select %p26, 0, %s25
      %s28 = sadd.s32 1, %s19
      %s29 = scalar_select %p26, %s28, %s19
      %p30 = scmp.ge.s32.totalorder %s29, 3
      %s31 = scalar_select %p30, 0, %s29
      %s32 = ssub.s32 %s20, %s27
      %p33 = scmp.eq.s32.totalorder %s32, 0
      %s35 = sadd.s32 %s34, 1
      %s36 = scalar_select %p33, %s34, %s35
      %p39 = pneg %p33
      %p40 = scmp.eq.s32.totalorder %s12, 2
      %p41 = por %p39, %p40
      %p42 = scmp.ne.s32.totalorder %s34, %s37
      %p43 = scmp.eq.s32.totalorder %s12, 0
      %p44 = por %p42, %p43
      %p45 = scmp.ne.s32.totalorder %s34, %s37
      %p46 = scmp.eq.s32.totalorder %s17, 2
      %p47 = por %p45, %p46
      %p48 = scmp.ne.s32.totalorder %s37, %s38
      %p49 = scmp.eq.s32.totalorder %s17, 0
      %p50 = por %p48, %p49
      %p51 = scmp.ne.s32.totalorder %s37, %s38
      %p52 = scmp.eq.s32.totalorder %s18, 2
      %p53 = por %p51, %p52
      %p55 = scmp.ne.s32.totalorder %s38, %s54
      %p56 = scmp.eq.s32.totalorder %s18, 0
      %p57 = por %p55, %p56
      %s59 = sadd.s32 %s58, 1
      %p62 = scmp.eq.s32.totalorder %s12, 2
      %p63 = scmp.ne.s32.totalorder %s58, %s60
      %p64 = scmp.eq.s32.totalorder %s12, 0
      %p65 = por %p63, %p64
      %p66 = scmp.ne.s32.totalorder %s58, %s60
      %p67 = scmp.eq.s32.totalorder %s17, 2
      %p68 = por %p66, %p67
      %p69 = scmp.ne.s32.totalorder %s60, %s61
      %p70 = scmp.eq.s32.totalorder %s17, 0
      %p71 = por %p69, %p70
      %p72 = scmp.ne.s32.totalorder %s60, %s61
      %p73 = scmp.eq.s32.totalorder %s18, 2
      %p74 = por %p72, %p73
      %p76 = scmp.ne.s32.totalorder %s61, %s75
      %p77 = scmp.eq.s32.totalorder %s18, 0
      %p78 = por %p76, %p77
      %s80 = sadd.s32 %s79, 1
      %p83 = scmp.eq.s32.totalorder %s12, 2
      %p84 = scmp.ne.s32.totalorder %s79, %s81
      %p85 = scmp.eq.s32.totalorder %s12, 0
      %p86 = por %p84, %p85
      %p87 = scmp.ne.s32.totalorder %s79, %s81
      %p88 = scmp.eq.s32.totalorder %s17, 2
      %p89 = por %p87, %p88
      %p90 = scmp.ne.s32.totalorder %s81, %s82
      %p91 = scmp.eq.s32.totalorder %s17, 0
      %p92 = por %p90, %p91
      %p93 = scmp.ne.s32.totalorder %s81, %s82
      %p94 = scmp.eq.s32.totalorder %s18, 2
      %p95 = por %p93, %p94
      %p97 = scmp.ne.s32.totalorder %s82, %s96
      %p98 = scmp.eq.s32.totalorder %s18, 0
      %p99 = por %p97, %p98
      %s101 = sadd.s32 %s100, 1
      %p104 = scmp.eq.s32.totalorder %s12, 2
      %p105 = scmp.ne.s32.totalorder %s100, %s102
      %p106 = scmp.eq.s32.totalorder %s12, 0
      %p107 = por %p105, %p106
      %p108 = scmp.ne.s32.totalorder %s100, %s102
      %p109 = scmp.eq.s32.totalorder %s17, 2
      %p110 = por %p108, %p109
      %p111 = scmp.ne.s32.totalorder %s102, %s103
      %p112 = scmp.eq.s32.totalorder %s17, 0
      %p113 = por %p111, %p112
      %p114 = scmp.ne.s32.totalorder %s102, %s103
      %p115 = scmp.eq.s32.totalorder %s18, 2
      %p116 = por %p114, %p115
      %p118 = scmp.ne.s32.totalorder %s103, %s117
      %p119 = scmp.eq.s32.totalorder %s18, 0
      %p120 = por %p118, %p119
      %s122 = sadd.s32 %s121, 1
      %p125 = scmp.eq.s32.totalorder %s12, 2
      %p126 = scmp.ne.s32.totalorder %s121, %s123
      %p127 = scmp.eq.s32.totalorder %s12, 0
      %p128 = por %p126, %p127
      %p129 = scmp.ne.s32.totalorder %s121, %s123
      %p130 = scmp.eq.s32.totalorder %s17, 2
      %p131 = por %p129, %p130
      %p132 = scmp.ne.s32.totalorder %s123, %s124
      %p133 = scmp.eq.s32.totalorder %s17, 0
      %p134 = por %p132, %p133
      %p135 = scmp.ne.s32.totalorder %s123, %s124
      %p136 = scmp.eq.s32.totalorder %s18, 2
      %p137 = por %p135, %p136
      %p139 = scmp.ne.s32.totalorder %s124, %s138
      %p140 = scmp.eq.s32.totalorder %s18, 0
      %p141 = por %p139, %p140
      %s142 = ssub.s32 %s20, %s27
      %p143 = scmp.eq.s32.totalorder %s142, 0
      %s145 = sadd.s32 %s144, 1
      %s146 = scalar_select %p143, %s144, %s145
      %p149 = pneg %p143
      %p150 = scmp.eq.s32.totalorder %s12, 2
      %p151 = por %p149, %p150
      %p152 = scmp.ne.s32.totalorder %s144, %s147
      %p153 = scmp.eq.s32.totalorder %s12, 0
      %p154 = por %p152, %p153
      %p155 = scmp.ne.s32.totalorder %s144, %s147
      %p156 = scmp.eq.s32.totalorder %s17, 2
      %p157 = por %p155, %p156
      %p158 = scmp.ne.s32.totalorder %s147, %s148
      %p159 = scmp.eq.s32.totalorder %s17, 0
      %p160 = por %p158, %p159
      %p161 = scmp.ne.s32.totalorder %s147, %s148
      %p162 = scmp.eq.s32.totalorder %s18, 2
      %p163 = por %p161, %p162
      %p165 = scmp.ne.s32.totalorder %s148, %s164
      %p166 = scmp.eq.s32.totalorder %s18, 0
      %p167 = por %p165, %p166
      %p168 = scmp.le.s32.totalorder 1, %s12
      %p169 = scmp.lt.s32.totalorder %s12, 4
      %p170 = pnand %p168, %p169
      %p171 = pneg %p170
      // Predicated region
      $region9: #{tpu_custom_call.1} parent=5 // pred_check
        _
      $region10: #{tpu_custom_call.1} parent=5 // pred_check_branch
        %173 = sbr.rel (%p170) target = $region12
      $region11: #{tpu_custom_call.1} parent=5 // pred_region
        %s174 = ssub.s32 %s12, 1
        // Predicated region
        $region13: #{tpu_custom_call.1} parent=11 // pred_check
          %p175 = pneg %p50
        $region14: #{tpu_custom_call.1} parent=11 // pred_check_branch
          %177 = sbr.rel (%p175) target = $region16
        $region15: #{tpu_custom_call.1} parent=11 // pred_region
          %p178 = scmp.lt.s32.totalorder %s22, 0
          %s179 = scalar_select %p178, %s22, 0
          %s180 = smul.addr %s179, 4
          %s181 = scalar_lea.vmem %s0, %s180
        $region16: #{tpu_custom_call.1} parent=11 // pred_fallthru
          _
        // Predicated region
        $region17: #{tpu_custom_call.1} parent=11 // pred_check
          %p182 = pneg %p71
        $region18: #{tpu_custom_call.1} parent=11 // pred_check_branch
          %184 = sbr.rel (%p182) target = $region20
        $region19: #{tpu_custom_call.1} parent=11 // pred_region
          _
        $region20: #{tpu_custom_call.1} parent=11 // pred_fallthru
          _
        // Predicated region
        $region21: #{tpu_custom_call.1} parent=11 // pred_check
          %p185 = pneg %p92
        $region22: #{tpu_custom_call.1} parent=11 // pred_check_branch
          %187 = sbr.rel (%p185) target = $region24
        $region23: #{tpu_custom_call.1} parent=11 // pred_region
          _
        $region24: #{tpu_custom_call.1} parent=11 // pred_fallthru
          _
        // Predicated region
        $region25: #{tpu_custom_call.1} parent=11 // pred_check
          %p188 = pneg %p113
        $region26: #{tpu_custom_call.1} parent=11 // pred_check_branch
          %190 = sbr.rel (%p188) target = $region28
        $region27: #{tpu_custom_call.1} parent=11 // pred_region
          _
        $region28: #{tpu_custom_call.1} parent=11 // pred_fallthru
          _
        // Predicated region
        $region29: #{tpu_custom_call.1} parent=11 // pred_check
          %p191 = pneg %p134
        $region30: #{tpu_custom_call.1} parent=11 // pred_check_branch
          %193 = sbr.rel (%p191) target = $region32
        $region31: #{tpu_custom_call.1} parent=11 // pred_region
          _
        $region32: #{tpu_custom_call.1} parent=11 // pred_fallthru
          _
      $region12: #{tpu_custom_call.1} parent=5 // pred_fallthru
        _
      %p194 = scmp.lt.s32.totalorder %s12, 3
      // Predicated region
      $region33: #{tpu_custom_call.1} parent=5 // pred_check
        %p195 = pneg %p194
      $region34: #{tpu_custom_call.1} parent=5 // pred_check_branch
        %197 = sbr.rel (%p195) target = $region36
      $region35: #{tpu_custom_call.1} parent=5 // pred_region
        _
      $region36: #{tpu_custom_call.1} parent=5 // pred_fallthru
        _
      %p198 = scmp.le.s32.totalorder 1, %s12
      %p199 = scmp.lt.s32.totalorder %s12, 4
      %p200 = pnand %p198, %p199
      %p201 = pneg %p200
      // Predicated region
      $region37: #{tpu_custom_call.1} parent=5 // pred_check
        _
      $region38: #{tpu_custom_call.1} parent=5 // pred_check_branch
        %203 = sbr.rel (%p200) target = $region40
      $region39: #{tpu_custom_call.1} parent=5 // pred_region
        %s204 = ssub.s32 %s12, 1
        %p205 = scmp.lt.s32.totalorder %s22, 0
        %s206 = scalar_select %p205, %s22, 0
        %s207 = smul.addr %s206, 4
        %s208 = scalar_lea.vmem %s0, %s207
        %p209 = pneg %p50
        %p210 = pneg %p47
        %p211 = pneg %p71
        %p212 = pneg %p68
        %p213 = pneg %p92
        %p214 = pneg %p89
        %p215 = pneg %p113
        %p216 = pneg %p110
        %p217 = pneg %p134
        %p218 = pneg %p131
        %p219 = pneg %p160
        %p220 = pneg %p157
        %p221 = scmp.lt.s32.totalorder %s22, 0
        %s222 = scalar_select %p221, %s22, 0
        %s223 = smul.addr %s222, 4
        %s224 = scalar_lea.vmem %s0, %s223
        %v226 = vlaneseq
        %v227 = vshrl.u32 %v226, 7
        %s228 = smul.u32 %s22, 8
        %v229 = vstv %s228
        %v230 = vadd.s32 %v227, %v229
        %vm231 = vcmp.lt.s32.totalorder %v230, 8
        %v232 = vsel %vm231, 1, 0
        %v233 = vcvt.s32.f32 %v232
        %v234 = vld [vmem:[%s224] sm:$0xf]
        %v235 = vld [vmem:[%s1] sm:$0xf]
        %v236 = vld [vmem:[%s1 + $0x4] sm:$0xf]
        %v239 = vunpack.c.l.b16 %v235
        %v240 = vunpack.c.l.b16 %v236
        %v241 = vpack.c.b16 %v240, %v239
        %vm243 = vcmask 130048
        %v245 = vsel %vm243, %v234, 0
        %247 = vmatprep.subr.bf16.mxu0 0
        %248 = vmatpush1.bf16.msra.mxu0 %v241
        %249 = vmatprep.subr.bf16.mxu0 0
        %250 = vmatpush1.bf16.msra.mxu0 0
        %251 = vmatprep.subr.bf16.mxu0 0
        %252 = vmatpush1.bf16.msra.mxu0 0
        %253 = vmatprep.subr.bf16.mxu0 0
        %254 = vmatpush1.bf16.msra.mxu0 0
        %255 = vmatprep.subr.bf16.mxu0 0
        %256 = vmatpush1.bf16.msra.mxu0 0
        %257 = vmatprep.subr.bf16.mxu0 0
        %258 = vmatpush1.bf16.msra.mxu0 0
        %259 = vmatprep.subr.bf16.mxu0 0
        %260 = vmatpush1.bf16.msra.mxu0 0
        %261 = vmatprep.subr.bf16.mxu0 0
        %262 = vmatpush1.bf16.msra.mxu0 0
        %263 = vmatprep.subr.bf16.mxu0 0
        %264 = vmatpush1.bf16.msra.mxu0 0
        %265 = vmatprep.subr.bf16.mxu0 0
        %266 = vmatpush1.bf16.msra.mxu0 0
        %267 = vmatprep.subr.bf16.mxu0 0
        %268 = vmatpush1.bf16.msra.mxu0 0
        %269 = vmatprep.subr.bf16.mxu0 0
        %270 = vmatpush1.bf16.msra.mxu0 0
        %271 = vmatprep.subr.bf16.mxu0 0
        %272 = vmatpush1.bf16.msra.mxu0 0
        %273 = vmatprep.subr.bf16.mxu0 0
        %274 = vmatpush1.bf16.msra.mxu0 0
        %275 = vmatprep.subr.bf16.mxu0 0
        %276 = vmatpush1.bf16.msra.mxu0 0
        %277 = vmatprep.subr.bf16.mxu0 0
        %278 = vmatpush1.bf16.msra.mxu0 0
        %279 = vmatprep.mubr.bf16.mxu0 0
        %280 = vmatmul.mubr.bf16.gmra.mrb[0].mxu0 %v245
        %v281 = vpop.f32.mrb[0].mxu0
        %v282 = vadd.f32 0.0, %v281
        %v283 = vpop.f32.mrb[0].mxu0
        %v284 = vpop.f32.mrb[0].mxu0
        %v285 = vpop.f32.mrb[0].mxu0
        %286 = vdwg.mxu0
        %p287 = scmp.eq.s32.totalorder %s21, 0
        // Predicated region
        $region41: #{tpu_custom_call.1} parent=39 // pred_check
          %p288 = pneg %p287
        $region42: #{tpu_custom_call.1} parent=39 // pred_check_branch
          %290 = sbr.rel (%p288) target = $region44
        $region43: #{tpu_custom_call.1} parent=39 // pred_region
          %p291 = scmp.eq.s32.totalorder %s22, 0
          // Predicated region
          $region45: #{tpu_custom_call.1} parent=43 // pred_check
            %p292 = pneg %p291
          $region46: #{tpu_custom_call.1} parent=43 // pred_check_branch
            %294 = sbr.rel (%p292) target = $region48
          $region47: #{tpu_custom_call.1} parent=43 // pred_region
            %vm295 = vcmask 517120
            %296 = vst.msk [vmem:[#allocation2] sm:$0x3] %vm295, 0.0
          $region48: #{tpu_custom_call.1} parent=43 // pred_fallthru
            _
          %v297 = vmul.f32 %v282, %v233
          %v298 = vld [vmem:[#allocation2] sm:$0x1]
          %vm299 = vcmask 523264
          %v300 = vsel %vm299, %v297, 0.0
          %v301 = vrot.slane %v300, 4
          %v302 = vadd.f32 %v300, %v301
          %v303 = vrot.slane %v302, 2
          %v304 = vadd.f32 %v302, %v303
          %v305 = vrot.slane %v304, 1
          %v306 = vadd.f32 %v304, %v305
          %v307 = vadd.f32 %v298, %v306
          %vm308 = vcmask 516096
          %309 = vst.msk [vmem:[#allocation2] sm:$0x1] %vm308, %v307
          %v310 = vld [vmem:[#allocation2 + $0x1] sm:$0x1]
          %v311 = vmul.f32 %v297, %v282
          %v312 = vsel %vm299, %v311, 0.0
          %v313 = vrot.slane %v312, 4
          %v314 = vadd.f32 %v312, %v313
          %v315 = vrot.slane %v314, 2
          %v316 = vadd.f32 %v314, %v315
          %v317 = vrot.slane %v316, 1
          %v318 = vadd.f32 %v316, %v317
          %v319 = vadd.f32 %v310, %v318
          %320 = vst.msk [vmem:[#allocation2 + $0x1] sm:$0x1] %vm308, %v319
          %vm321 = vcmask 64512
          %322 = vst.msk [vmem:[#allocation6] sm:$0xff] %vm321, 0.0
        $region44: #{tpu_custom_call.1} parent=39 // pred_fallthru
          _
        %p323 = scmp.ge.s32.totalorder %s21, 1
        // Predicated region
        $region49: #{tpu_custom_call.1} parent=39 // pred_check
          %p324 = pneg %p323
        $region50: #{tpu_custom_call.1} parent=39 // pred_check_branch
          %326 = sbr.rel (%p324) target = $region52
        $region51: #{tpu_custom_call.1} parent=39 // pred_region
          %p327 = scmp.eq.s32.totalorder %s21, 1
          %p328 = scmp.eq.s32.totalorder %s22, 0
          %p329 = pnand %p327, %p328
          %p330 = pneg %p329
          // Predicated region
          $region53: #{tpu_custom_call.1} parent=51 // pred_check
            _
          $region54: #{tpu_custom_call.1} parent=51 // pred_check_branch
            %332 = sbr.rel (%p329) target = $region56
          $region55: #{tpu_custom_call.1} parent=51 // pred_region
            %v333 = vld [vmem:[#allocation2] sm:$0x1]
            %v334 = vmul.f32 %v333, 0.125
            %v335 = vld [vmem:[#allocation2 + $0x1] sm:$0x1]
            %v336 = vmul.f32 %v335, 0.125
            %v337 = vmul.f32 %v334, %v334
            %v338 = vsub.f32 %v336, %v337
            %v339 = vmax.f32 %v338, 0.0
            %v340 = vld [vmem:[%s4] sm:$0x1]
            %v341 = vadd.f32 %v339, 1e-05
            %v342 = vrsqrt.pop %v341
            %v343 = vmul.f32 %v340, %v342
            %vm344 = vcmask 516096
            %345 = vst.msk [vmem:[#allocation4] sm:$0x1] %vm344, %v343
            %v346 = vld [vmem:[%s4 + $0x1] sm:$0x1]
            %v347 = vmul.f32 %v334, %v343
            %v348 = vsub.f32 %v346, %v347
            %349 = vst.msk [vmem:[#allocation4 + $0x1] sm:$0x1] %vm344, %v348
            %vm350 = vcmask 254976
            %351 = vst.msk [vmem:[#allocation3] sm:$0x3] %vm350, 0.0
          $region56: #{tpu_custom_call.1} parent=51 // pred_fallthru
            _
          %v352 = vld [vmem:[#allocation4] sm:$0x1]
          %v353 = vlaneseq
          %v354 = vshrl.u32 %v353, 7
          %v355 = vsub.s32 0, %v354
          %v356 = vrot.slane %v352, %v355
          %v357 = vmul.f32 %v282, %v356
          %v358 = vld [vmem:[#allocation4 + $0x1] sm:$0x1]
          %v359 = vlaneseq
          %v360 = vshrl.u32 %v359, 7
          %v361 = vsub.s32 0, %v360
          %v362 = vrot.slane %v358, %v361
          %v363 = vadd.f32 %v357, %v362
          %v364 = vmax.f32 %v363, 0.0
          %v365 = vpack.c.bf16 %v364, %v364
          %v366 = vld [vmem:[%s2] sm:$0xf]
          %v367 = vld [vmem:[%s2 + $0x4] sm:$0xf]
          %v368 = vld [vmem:[%s2 + $0x8] sm:$0xf]
          %v369 = vld [vmem:[%s2 + $0xc] sm:$0xf]
          %v370 = vld [vmem:[%s2 + $0x10] sm:$0xf]
          %v371 = vld [vmem:[%s2 + $0x14] sm:$0xf]
          %v372 = vld [vmem:[%s2 + $0x18] sm:$0xf]
          %v373 = vld [vmem:[%s2 + $0x1c] sm:$0xf]
          %v382 = vunpack.c.l.b16 %v366
          %v383 = vunpack.c.l.b16 %v367
          %v384 = vunpack.c.l.b16 %v368
          %v385 = vunpack.c.l.b16 %v369
          %v386 = vunpack.c.l.b16 %v370
          %v387 = vunpack.c.l.b16 %v371
          %v388 = vunpack.c.l.b16 %v372
          %v389 = vunpack.c.l.b16 %v373
          %v390 = vpack.c.b16 %v383, %v382
          %v391 = vpack.c.b16 %v385, %v384
          %v392 = vpack.c.b16 %v387, %v386
          %v393 = vpack.c.b16 %v389, %v388
          %vm398 = vcmask 523264
          %v400 = vsel %vm398, %v365, 0
          %402 = vmatprep.subr.bf16.mxu0 0
          %403 = vmatpush1.bf16.msra.mxu0 %v390
          %404 = vmatprep.subr.bf16.mxu0 0
          %405 = vmatpush1.bf16.msra.mxu0 %v391
          %406 = vmatprep.subr.bf16.mxu0 0
          %407 = vmatpush1.bf16.msra.mxu0 %v392
          %408 = vmatprep.subr.bf16.mxu0 0
          %409 = vmatpush1.bf16.msra.mxu0 %v393
          %410 = vmatprep.subr.bf16.mxu0 0
          %411 = vmatpush1.bf16.msra.mxu0 0
          %412 = vmatprep.subr.bf16.mxu0 0
          %413 = vmatpush1.bf16.msra.mxu0 0
          %414 = vmatprep.subr.bf16.mxu0 0
          %415 = vmatpush1.bf16.msra.mxu0 0
          %416 = vmatprep.subr.bf16.mxu0 0
          %417 = vmatpush1.bf16.msra.mxu0 0
          %418 = vmatprep.subr.bf16.mxu0 0
          %419 = vmatpush1.bf16.msra.mxu0 0
          %420 = vmatprep.subr.bf16.mxu0 0
          %421 = vmatpush1.bf16.msra.mxu0 0
          %422 = vmatprep.subr.bf16.mxu0 0
          %423 = vmatpush1.bf16.msra.mxu0 0
          %424 = vmatprep.subr.bf16.mxu0 0
          %425 = vmatpush1.bf16.msra.mxu0 0
          %426 = vmatprep.subr.bf16.mxu0 0
          %427 = vmatpush1.bf16.msra.mxu0 0
          %428 = vmatprep.subr.bf16.mxu0 0
          %429 = vmatpush1.bf16.msra.mxu0 0
          %430 = vmatprep.subr.bf16.mxu0 0
          %431 = vmatpush1.bf16.msra.mxu0 0
          %432 = vmatprep.subr.bf16.mxu0 0
          %433 = vmatpush1.bf16.msra.mxu0 0
          %434 = vmatprep.mubr.bf16.mxu0 0
          %435 = vmatmul.mubr.bf16.gmra.mrb[0].mxu0 %v400
          %v436 = vpop.f32.mrb[0].mxu0
          %v437 = vadd.f32 0.0, %v436
          %v438 = vpop.f32.mrb[0].mxu0
          %v439 = vpop.f32.mrb[0].mxu0
          %v440 = vpop.f32.mrb[0].mxu0
          %441 = vdwg.mxu0
          // Predicated region
          $region57: #{tpu_custom_call.1} parent=51 // pred_check
            %p442 = pneg %p327
          $region58: #{tpu_custom_call.1} parent=51 // pred_check_branch
            %444 = sbr.rel (%p442) target = $region60
          $region59: #{tpu_custom_call.1} parent=51 // pred_region
            %v445 = vmul.f32 %v437, %v233
            %v446 = vld [vmem:[#allocation3] sm:$0x1]
            %vm447 = vcmask 261120
            %v448 = vsel %vm447, %v445, 0.0
            %v449 = vrot.slane %v448, 4
            %v450 = vadd.f32 %v448, %v449
            %v451 = vrot.slane %v450, 2
            %v452 = vadd.f32 %v450, %v451
            %v453 = vrot.slane %v452, 1
            %v454 = vadd.f32 %v452, %v453
            %v455 = vadd.f32 %v446, %v454
            %vm456 = vcmask 253952
            %457 = vst.msk [vmem:[#allocation3] sm:$0x1] %vm456, %v455
            %v458 = vld [vmem:[#allocation3 + $0x1] sm:$0x1]
            %v459 = vmul.f32 %v445, %v437
            %v460 = vsel %vm447, %v459, 0.0
            %v461 = vrot.slane %v460, 4
            %v462 = vadd.f32 %v460, %v461
            %v463 = vrot.slane %v462, 2
            %v464 = vadd.f32 %v462, %v463
            %v465 = vrot.slane %v464, 1
            %v466 = vadd.f32 %v464, %v465
            %v467 = vadd.f32 %v458, %v466
            %468 = vst.msk [vmem:[#allocation3 + $0x1] sm:$0x1] %vm456, %v467
            %vm469 = vcmask 64512
            %470 = vst.msk [vmem:[#allocation6] sm:$0xff] %vm469, 0.0
          $region60: #{tpu_custom_call.1} parent=51 // pred_fallthru
            _
          %p471 = scmp.eq.s32.totalorder %s21, 2
          // Predicated region
          $region61: #{tpu_custom_call.1} parent=51 // pred_check
            %p472 = pneg %p471
          $region62: #{tpu_custom_call.1} parent=51 // pred_check_branch
            %474 = sbr.rel (%p472) target = $region64
          $region63: #{tpu_custom_call.1} parent=51 // pred_region
            // Predicated region
            $region65: #{tpu_custom_call.1} parent=63 // pred_check
              %p475 = pneg %p328
            $region66: #{tpu_custom_call.1} parent=63 // pred_check_branch
              %477 = sbr.rel (%p475) target = $region68
            $region67: #{tpu_custom_call.1} parent=63 // pred_region
              %v478 = vld [vmem:[#allocation3] sm:$0x1]
              %v479 = vmul.f32 %v478, 0.125
              %v480 = vld [vmem:[#allocation3 + $0x1] sm:$0x1]
              %v481 = vmul.f32 %v480, 0.125
              %v482 = vmul.f32 %v479, %v479
              %v483 = vsub.f32 %v481, %v482
              %v484 = vmax.f32 %v483, 0.0
              %v485 = vld [vmem:[%s4 + $0x2] sm:$0x1]
              %v486 = vadd.f32 %v484, 1e-05
              %v487 = vrsqrt.pop %v486
              %v488 = vmul.f32 %v485, %v487
              %vm489 = vcmask 253952
              %490 = vst.msk [vmem:[#allocation5] sm:$0x1] %vm489, %v488
              %v491 = vld [vmem:[%s4 + $0x3] sm:$0x1]
              %v492 = vmul.f32 %v479, %v488
              %v493 = vsub.f32 %v491, %v492
              %494 = vst.msk [vmem:[#allocation5 + $0x1] sm:$0x1] %vm489, %v493
            $region68: #{tpu_custom_call.1} parent=63 // pred_fallthru
              _
            %v495 = vld [vmem:[#allocation5] sm:$0x1]
            %v496 = vlaneseq
            %v497 = vshrl.u32 %v496, 7
            %v498 = vsub.s32 0, %v497
            %v499 = vrot.slane %v495, %v498
            %v500 = vmul.f32 %v437, %v499
            %v501 = vld [vmem:[#allocation5 + $0x1] sm:$0x1]
            %v502 = vlaneseq
            %v503 = vshrl.u32 %v502, 7
            %v504 = vsub.s32 0, %v503
            %v505 = vrot.slane %v501, %v504
            %v506 = vadd.f32 %v500, %v505
            %v507 = vmax.f32 %v506, 0.0
            %v508 = vpack.c.bf16 %v507, %v507
            %v509 = vld [vmem:[%s3] sm:$0xf]
            %v510 = vld [vmem:[%s3 + $0x4] sm:$0xf]
            %v511 = vld [vmem:[%s3 + $0x8] sm:$0xf]
            %v512 = vld [vmem:[%s3 + $0xc] sm:$0xf]
            %v513 = vld [vmem:[%s4 + $0x4] sm:$0x1]
            %v514 = vlaneseq
            %v515 = vshrl.u32 %v514, 7
            %v516 = vsub.s32 0, %v515
            %v517 = vrot.slane %v513, %v516
            %v522 = vunpack.c.l.b16 %v509
            %v523 = vunpack.c.l.b16 %v510
            %v524 = vunpack.c.l.b16 %v511
            %v525 = vunpack.c.l.b16 %v512
            %v526 = vpack.c.b16 %v523, %v522
            %v527 = vpack.c.b16 %v525, %v524
            %vm530 = vcmask 261120
            %v532 = vsel %vm530, %v508, 0
            %534 = vmatprep.subr.bf16.mxu0 0
            %535 = vmatpush1.bf16.msra.mxu0 %v526
            %536 = vmatprep.subr.bf16.mxu0 0
            %537 = vmatpush1.bf16.msra.mxu0 %v527
            %538 = vmatprep.subr.bf16.mxu0 0
            %539 = vmatpush1.bf16.msra.mxu0 0
            %540 = vmatprep.subr.bf16.mxu0 0
            %541 = vmatpush1.bf16.msra.mxu0 0
            %542 = vmatprep.subr.bf16.mxu0 0
            %543 = vmatpush1.bf16.msra.mxu0 0
            %544 = vmatprep.subr.bf16.mxu0 0
            %545 = vmatpush1.bf16.msra.mxu0 0
            %546 = vmatprep.subr.bf16.mxu0 0
            %547 = vmatpush1.bf16.msra.mxu0 0
            %548 = vmatprep.subr.bf16.mxu0 0
            %549 = vmatpush1.bf16.msra.mxu0 0
            %550 = vmatprep.subr.bf16.mxu0 0
            %551 = vmatpush1.bf16.msra.mxu0 0
            %552 = vmatprep.subr.bf16.mxu0 0
            %553 = vmatpush1.bf16.msra.mxu0 0
            %554 = vmatprep.subr.bf16.mxu0 0
            %555 = vmatpush1.bf16.msra.mxu0 0
            %556 = vmatprep.subr.bf16.mxu0 0
            %557 = vmatpush1.bf16.msra.mxu0 0
            %558 = vmatprep.subr.bf16.mxu0 0
            %559 = vmatpush1.bf16.msra.mxu0 0
            %560 = vmatprep.subr.bf16.mxu0 0
            %561 = vmatpush1.bf16.msra.mxu0 0
            %562 = vmatprep.subr.bf16.mxu0 0
            %563 = vmatpush1.bf16.msra.mxu0 0
            %564 = vmatprep.subr.bf16.mxu0 0
            %565 = vmatpush1.bf16.msra.mxu0 0
            %566 = vmatprep.mubr.bf16.mxu0 0
            %567 = vmatmul.mubr.bf16.gmra.mrb[0].mxu0 %v532
            %v568 = vpop.f32.mrb[0].mxu0
            %v569 = vadd.f32 %v517, %v568
            %v570 = vpop.f32.mrb[0].mxu0
            %v571 = vpop.f32.mrb[0].mxu0
            %v572 = vpop.f32.mrb[0].mxu0
            %573 = vdwg.mxu0
            %v574 = vtanh.pop %v569
            %vm575 = vcmask 64512
            %576 = vst.msk [vmem:[#allocation6] sm:$0xff] %vm575, %v574
          $region64: #{tpu_custom_call.1} parent=51 // pred_fallthru
            _
        $region52: #{tpu_custom_call.1} parent=39 // pred_fallthru
          _
        // Predicated region
        $region69: #{tpu_custom_call.1} parent=39 // pred_check
          %p577 = pneg %p157
        $region70: #{tpu_custom_call.1} parent=39 // pred_check_branch
          %579 = sbr.rel (%p577) target = $region72
        $region71: #{tpu_custom_call.1} parent=39 // pred_region
          %s581 = ssub.s32 128, 128
          %582 = vsyncadd [#allocation7], %s581
          %s583 = smul.addr %s22, 128
          %s584 = scalar_lea.hbm %s5, %s583
          %s586 = sshll.u32 [#allocation6], 4
          %s587 = int_to_ptr.vmem [resolvable:$true] %s586
          %589 = dma.vmem_to_hbm [thread:$0]  %s587, 128, %s584, [#allocation7]
        $region72: #{tpu_custom_call.1} parent=39 // pred_fallthru
          _
        // Predicated region
        $region73: #{tpu_custom_call.1} parent=39 // pred_check
          %p590 = pneg %p157
        $region74: #{tpu_custom_call.1} parent=39 // pred_check_branch
          %592 = sbr.rel (%p590) target = $region76
        $region75: #{tpu_custom_call.1} parent=39 // pred_region
          %593 = dma.done [#allocation7], 128
        $region76: #{tpu_custom_call.1} parent=39 // pred_fallthru
          _
      $region40: #{tpu_custom_call.1} parent=5 // pred_fallthru
        _
      %p594 = scmp.le.s32.totalorder 2, %s12
      // Predicated region
      $region77: #{tpu_custom_call.1} parent=5 // pred_check
        %p595 = pneg %p594
      $region78: #{tpu_custom_call.1} parent=5 // pred_check_branch
        %597 = sbr.rel (%p595) target = $region80
      $region79: #{tpu_custom_call.1} parent=5 // pred_region
        %s598 = ssub.s32 %s12, 2
      $region80: #{tpu_custom_call.1} parent=5 // pred_fallthru
        _
    $region6: #{tpu_custom_call.1} parent=1 // loop_footer
      %s16 = sadd.s32 1, %s12
    $region7: #{tpu_custom_call.1} parent=1 // loop_footer_branch
      %11 = sbr.rel target = $region3
    $region8: #{tpu_custom_call.1} parent=1 // loop_exit
      _
    %599 = vsyncpa [#allocation7], 1
    %s600 = scalar_lea.sflag [#allocation7], 1
    %601 = vsyncpa %s600, 1

</llo_original>
